<compile_context>
chip_gen: v5e
topology: v5e:2x2
jax: 0.10.0
libtpu: 0.0.40
codegen_flags: <defaults>
</compile_context>

<pallas_src>
import jax
import jax.numpy as jnp
from jax.experimental import pallas as pl
from jax.experimental.pallas import tpu as pltpu

_SUB = 8          # sublane quantum (f32)
_LANE = 128       # lane quantum
_MAX_TILE_G = 2048            # genome (lane) chunk cap
_MAX_TILE_P = 1024            # row tile cap
_IN_VMEM_BUDGET = 24 * 1024 * 1024   # double-buffered input bytes target
_VMEM_LIMIT = 48 * 1024 * 1024       # safe on v5e/v6e (128 MiB) and v7x (64 MiB)


def _round_up(x, m):
    return (x + m - 1) // m * m


def _fitness_kernel(pop_ref, fit_ref):
    # pop_ref : (TILE_P, TILE_G) native-dtype VMEM tile
    # fit_ref : (TILE_P, 1)      float32 VMEM tile, resident across the k axis
    k = pl.program_id(1)

    @pl.when(k == 0)
    def _():
        fit_ref[...] = jnp.zeros_like(fit_ref)

    # In-kernel widen to f32 (free on the VPU under the DMA); square + lane
    # reduce (XLU).  Compute-unit choice is irrelevant: ~0.5 flop/byte.
    x = pop_ref[...].astype(jnp.float32)
    fit_ref[...] += jnp.sum(x * x, axis=-1, keepdims=True)


class BasicEvaluator:
    """JAX/Pallas counterpart of gapa.framework.evaluator.BasicEvaluator."""

    def __init__(self, pop_size, device=None):
        self.pop_size = pop_size
        self.device = device

    def forward(self, population):
        """Evaluate a (pop_size, genome_len) population -> (pop_size,) fitness."""
        pop_size, genome_len = population.shape
        assert pop_size == self.pop_size
        itemsize = population.dtype.itemsize

        # ---- genome (lane) tiling -------------------------------------------
        if genome_len <= _MAX_TILE_G:
            tile_g = genome_len                      # full-dim block: always legal
            genome_padded = genome_len
        else:
            tile_g = _MAX_TILE_G
            genome_padded = _round_up(genome_len, tile_g)

        # ---- row (sublane) tiling, sized to the VMEM budget -----------------
        max_tile_p = max(_SUB, (_IN_VMEM_BUDGET // (2 * tile_g * itemsize)) // _SUB * _SUB)
        # keep >= 2 row-grid steps when possible (v7x megacore sharding)
        tile_p = min(_MAX_TILE_P, max_tile_p, _round_up(pl.cdiv(pop_size, 2), _SUB))
        tile_p = max(tile_p, _SUB)
        pop_padded = _round_up(pop_size, tile_p)

        # ---- pad to the tile grid (zeros: exact for sum-of-squares) ---------
        pad_p = pop_padded - pop_size
        pad_g = genome_padded - genome_len
        if pad_p or pad_g:
            population = jnp.pad(population, ((0, pad_p), (0, pad_g)))

        grid = (pop_padded // tile_p, genome_padded // tile_g)

        fit = pl.pallas_call(
            _fitness_kernel,
            out_shape=jax.ShapeDtypeStruct((pop_padded, 1), jnp.float32),
            grid_spec=pltpu.PrefetchScalarGridSpec(
                num_scalar_prefetch=0,
                grid=grid,
                in_specs=[
                    pl.BlockSpec((tile_p, tile_g), lambda i, k: (i, k)),
                ],
                # same block index for all k -> resident accumulator, written
                # back once per row tile
                out_specs=pl.BlockSpec((tile_p, 1), lambda i, k: (i, 0)),
            ),
            compiler_params=pltpu.CompilerParams(
                dimension_semantics=("parallel", "arbitrary"),
                vmem_limit_bytes=_VMEM_LIMIT,
            ),
            cost_estimate=pl.CostEstimate(
                flops=2 * pop_padded * genome_padded,
                transcendentals=0,
                bytes_accessed=pop_padded * genome_padded * itemsize + pop_padded * 4,
            ),
        )(population)

        return fit[:pop_size, 0]

    def __call__(self, population):
        return self.forward(population)

    def _to_device(self, device):
        # TODO(synk): reference _to_device is `pass`; device placement is
        #             handled by JAX's default TPU backend here.
        self.device = device
        return self


def _reference(population):
    x = population.astype(jnp.float32)
    return jnp.sum(x * x, axis=-1)


if __name__ == "__main__":
    key = jax.random.PRNGKey(0)

    # Case 1: small aligned f32 population (grid rows = 2).
    pop_size, genome_len = 16, 128
    k1, k2, k3 = jax.random.split(key, 3)
    population = jax.random.normal(k1, (pop_size, genome_len), dtype=jnp.float32)
    fitness = jax.block_until_ready(BasicEvaluator(pop_size)(population))
    assert fitness.shape == (pop_size,)
    assert jnp.allclose(fitness, _reference(population), rtol=1e-5, atol=1e-3)

    # Case 2: non-multiple-of-8 population in bf16 (row padding + in-kernel cast).
    pop2, gen2 = 12, 384
    population2 = jax.random.normal(k2, (pop2, gen2), dtype=jnp.bfloat16)
    fitness2 = jax.block_until_ready(BasicEvaluator(pop2)(population2))
    assert fitness2.shape == (pop2,)
    assert jnp.allclose(fitness2, _reference(population2), rtol=1e-5, atol=1e-3)

    # Case 3: long genome (> 2048 lanes) exercising the k-axis accumulator.
    pop3, gen3 = 16, 4096
    population3 = jax.random.normal(k3, (pop3, gen3), dtype=jnp.float32)
    fitness3 = jax.block_until_ready(BasicEvaluator(pop3)(population3))
    assert fitness3.shape == (pop3,)
    assert jnp.allclose(fitness3, _reference(population3), rtol=1e-5, atol=1e-3)

    print("KERNEL_OK")
</pallas_src>

<mosaic_0001>
module attributes {stable_mosaic.version = 11 : i64} {
  func.func @_fitness_kernel(%arg0: i32, %arg1: i32, %arg2: memref<8x128xf32, #tpu.memory_space<vmem>>, %arg3: memref<8x1xf32, #tpu.memory_space<vmem>>) attributes {dimension_semantics = [#tpu.dimension_semantics<parallel>, #tpu.dimension_semantics<arbitrary>], iteration_bounds = array<i64: 2, 1>, scalar_prefetch = 0 : i64, scratch_operands = 0 : i64, tpu.core_type = #tpu.core_type<tc>, window_params = [{transform_indices = @transform_0, window_bounds = array<i64: 8, 128>}, {transform_indices = @transform_1, window_bounds = array<i64: 8, 1>}]} {
    %c0_i32 = arith.constant 0 : i32
    %0 = arith.cmpi eq, %arg1, %c0_i32 : i32
    %1 = arith.extui %0 : i1 to i32
    %c0_i32_0 = arith.constant 0 : i32
    %2 = arith.cmpi ne, %1, %c0_i32_0 : i32
    scf.if %2 {
      %cst_6 = arith.constant 0.000000e+00 : f32
      %10 = vector.broadcast %cst_6 : f32 to vector<8x1xf32>
      %c0_7 = arith.constant 0 : index
      %c0_8 = arith.constant 0 : index
      %11 = vector.load %arg3[%c0_7, %c0_8] : memref<8x1xf32, #tpu.memory_space<vmem>>, vector<8x1xf32>
      tpu.vector_store %arg3[%c0_7, %c0_8], %10 {strides = array<i32>} : memref<8x1xf32, #tpu.memory_space<vmem>>, vector<8x1xf32>,
    } else {
    }
    %c0 = arith.constant 0 : index
    %c0_1 = arith.constant 0 : index
    %3 = vector.load %arg2[%c0, %c0_1] : memref<8x128xf32, #tpu.memory_space<vmem>>, vector<8x128xf32>
    %c0_2 = arith.constant 0 : index
    %c0_3 = arith.constant 0 : index
    %4 = vector.load %arg3[%c0_2, %c0_3] : memref<8x1xf32, #tpu.memory_space<vmem>>, vector<8x1xf32>
    %5 = arith.mulf %3, %3 : vector<8x128xf32>
    %cst = arith.constant dense<0.000000e+00> : vector<8xf32>
    %6 = vector.multi_reduction <add>, %5, %cst [1] : vector<8x128xf32> to vector<8xf32>
    %7 = vector.shape_cast %6 : vector<8xf32> to vector<8x1xf32>
    %8 = arith.addf %4, %7 : vector<8x1xf32>
    %c0_4 = arith.constant 0 : index
    %c0_5 = arith.constant 0 : index
    %9 = vector.load %arg3[%c0_4, %c0_5] : memref<8x1xf32, #tpu.memory_space<vmem>>, vector<8x1xf32>
    tpu.vector_store %arg3[%c0_4, %c0_5], %8 {strides = array<i32>} : memref<8x1xf32, #tpu.memory_space<vmem>>, vector<8x1xf32>,
    return
  }
  func.func @transform_0(%arg0: i32, %arg1: i32) -> (i32, i32) {
    %c0_i32 = arith.constant 0 : i32
    return %arg0, %arg1 : i32, i32
  }
  func.func @transform_1(%arg0: i32, %arg1: i32) -> (i32, i32) {
    %c0_i32 = arith.constant 0 : i32
    %c0_i32_0 = arith.constant 0 : i32
    return %arg0, %c0_i32 : i32, i32
  }
}

</mosaic_0001>

<llo_original>
// kernel: tpu_custom_call.1
$region0: #{tpu_custom_call.1}
  #allocation0 [shape = 'u32[]', space=smem, size = 0x4, offset = 0x4, fixed_abs, tag = 'smem constant byte address 0x4 - core index']
  #allocation1 [shape = 'u32[72,128]{1,0:T(1,128)}', space=vmem, size = 0x9000, scoped, tag = 'internal scratch']
  %s0 = inlined_call_operand.hbm [shape: f32[16,128], index: 0, kind: input, shape index: {}]
  %s1 = inlined_call_operand.vmem [shape: f32[16,1], index: 1, kind: output, shape index: {}]
  %s2 = sld [smem:[#allocation0]]
  $region45: #{tpu_custom_call.1} parent=0
    _
  %s4 = ssub.s32 1, %s2
  %s5 = scalar_select 0, %s4, %s2
  $region1: #{tpu_custom_call.1} parent=0
    #allocation2 [shape = 'u8[8192]{0}', space=vmem, size = 0x2000, scoped, tag = 'input window, operand 0']
    #allocation3 [shape = 's32[2]{0}', space=sflag, size = 0x8, scoped, tag = 'scoped memory for tpu_custom_call.1']
    %6 = vsyncpa [#allocation3], 0
    %s7 = scalar_lea.sflag [#allocation3], 1
    %8 = vsyncpa %s7, 0
    loop: start=0, step=1, limit=4
    $region2: #{tpu_custom_call.1} parent=1 // loop_pre_header
      _
    $region3: #{tpu_custom_call.1} parent=1 // loop_header
      %s10 = sphi 0, %s14
      %p11 = scmp.ge.s32.totalorder %s10, 4
      %s17 = sphi 0, %s29
      %s18 = sphi 0, %s25
      %s19 = sphi 0, %s17
      %s20 = sphi 0, %s18
      %s21 = sphi 0, %s19
      %s22 = sphi 0, %s20
      %s34 = sphi 0, %s36
      %s37 = sphi 0, %s34
      %s38 = sphi 0, %s37
      %s54 = sphi 0, %s38
      %s60 = sphi 0, %s62
      %s63 = sphi 0, %s60
      %s64 = sphi 0, %s63
      %s80 = sphi 0, %s64
    $region4: #{tpu_custom_call.1} parent=1 // loop_header_branch
      %13 = sbr.rel (%p11) target = $region8
    $region5: #{tpu_custom_call.1} parent=1 // loop_body
      %s15 = ssub.s32 %s10, 1
      %s16 = ssub.s32 %s10, 2
      %s23 = sadd.s32 1, %s18
      %p24 = scmp.ge.s32.totalorder %s23, 1
      %s25 = scalar_select %p24, 0, %s23
      %s26 = sadd.s32 1, %s17
      %s27 = scalar_select %p24, %s26, %s17
      %p28 = scmp.ge.s32.totalorder %s27, 2
      %s29 = scalar_select %p28, 0, %s27
      %s30 = ssub.s32 %s17, %s29
      %s31 = ssub.s32 %s18, %s25
      %s32 = sor.u32 %s30, %s31
      %p33 = scmp.eq.s32.totalorder %s32, 0
      %s35 = sadd.s32 %s34, 1
      %s36 = scalar_select %p33, %s34, %s35
      %p39 = pneg %p33
      %p40 = scmp.eq.s32.totalorder %s10, 1
      %p41 = por %p39, %p40
      %p42 = scmp.ne.s32.totalorder %s34, %s37
      %p43 = scmp.eq.s32.totalorder %s10, 0
      %p44 = por %p42, %p43
      %p45 = scmp.ne.s32.totalorder %s34, %s37
      %p46 = scmp.eq.s32.totalorder %s15, 1
      %p47 = por %p45, %p46
      %p48 = scmp.ne.s32.totalorder %s37, %s38
      %p49 = scmp.eq.s32.totalorder %s15, 0
      %p50 = por %p48, %p49
      %p51 = scmp.ne.s32.totalorder %s37, %s38
      %p52 = scmp.eq.s32.totalorder %s16, 1
      %p53 = por %p51, %p52
      %p55 = scmp.ne.s32.totalorder %s38, %s54
      %p56 = scmp.eq.s32.totalorder %s16, 0
      %p57 = por %p55, %p56
      %s58 = ssub.s32 %s17, %s29
      %p59 = scmp.eq.s32.totalorder %s58, 0
      %s61 = sadd.s32 %s60, 1
      %s62 = scalar_select %p59, %s60, %s61
      %p65 = pneg %p59
      %p66 = scmp.eq.s32.totalorder %s10, 1
      %p67 = por %p65, %p66
      %p68 = scmp.ne.s32.totalorder %s60, %s63
      %p69 = scmp.eq.s32.totalorder %s10, 0
      %p70 = por %p68, %p69
      %p71 = scmp.ne.s32.totalorder %s60, %s63
      %p72 = scmp.eq.s32.totalorder %s15, 1
      %p73 = por %p71, %p72
      %p74 = scmp.ne.s32.totalorder %s63, %s64
      %p75 = scmp.eq.s32.totalorder %s15, 0
      %p76 = por %p74, %p75
      %p77 = scmp.ne.s32.totalorder %s63, %s64
      %p78 = scmp.eq.s32.totalorder %s16, 1
      %p79 = por %p77, %p78
      %p81 = scmp.ne.s32.totalorder %s64, %s80
      %p82 = scmp.eq.s32.totalorder %s16, 0
      %p83 = por %p81, %p82
      %p84 = scmp.le.s32.totalorder 1, %s10
      %p85 = scmp.lt.s32.totalorder %s10, 3
      %p86 = pnand %p84, %p85
      %p87 = pneg %p86
      // Predicated region
      $region9: #{tpu_custom_call.1} parent=5 // pred_check
        _
      $region10: #{tpu_custom_call.1} parent=5 // pred_check_branch
        %89 = sbr.rel (%p86) target = $region12
      $region11: #{tpu_custom_call.1} parent=5 // pred_region
        %s90 = ssub.s32 %s10, 1
      $region12: #{tpu_custom_call.1} parent=5 // pred_fallthru
        _
      %p91 = scmp.lt.s32.totalorder %s10, 2
      // Predicated region
      $region13: #{tpu_custom_call.1} parent=5 // pred_check
        %p92 = pneg %p91
      $region14: #{tpu_custom_call.1} parent=5 // pred_check_branch
        %94 = sbr.rel (%p92) target = $region16
      $region15: #{tpu_custom_call.1} parent=5 // pred_region
        // Predicated region
        $region17: #{tpu_custom_call.1} parent=15 // pred_check
          %p95 = pneg %p44
        $region18: #{tpu_custom_call.1} parent=15 // pred_check_branch
          %97 = sbr.rel (%p95) target = $region20
        $region19: #{tpu_custom_call.1} parent=15 // pred_region
          %s98 = sand.u32 %s34, 1
          %s99 = scalar_lea.sflag [#allocation3], %s98
          %s100 = sand.u32 %s34, 1
          %s101 = smul.addr %s100, 8
          %s102 = scalar_lea.vmem [#allocation2], %s101
          %104 = vsyncadd %s99, 0
          %s105 = sadd.s32 %s18, %s17
          %s106 = smul.addr %s105, 8
          %s107 = scalar_lea.hbm %s0, %s106
          %s109 = sshll.u32 %s107, 4
          %s110 = int_to_ptr.hbm [resolvable:$true] %s109
          %s111 = sshll.u32 %s102, 4
          %s112 = int_to_ptr.vmem [resolvable:$true] %s111
          %114 = dma.hbm_to_vmem [thread:$0]  %s110, 128, %s112, %s99
        $region20: #{tpu_custom_call.1} parent=15 // pred_fallthru
          _
      $region16: #{tpu_custom_call.1} parent=5 // pred_fallthru
        _
      %p115 = scmp.le.s32.totalorder 1, %s10
      %p116 = scmp.lt.s32.totalorder %s10, 3
      %p117 = pnand %p115, %p116
      %p118 = pneg %p117
      // Predicated region
      $region21: #{tpu_custom_call.1} parent=5 // pred_check
        _
      $region22: #{tpu_custom_call.1} parent=5 // pred_check_branch
        %120 = sbr.rel (%p117) target = $region24
      $region23: #{tpu_custom_call.1} parent=5 // pred_region
        %s121 = ssub.s32 %s10, 1
        %s122 = sand.u32 %s37, 1
        %s123 = scalar_lea.sflag [#allocation3], %s122
        %s124 = sand.u32 %s37, 1
        %s125 = smul.addr %s124, 8
        %s126 = scalar_lea.vmem [#allocation2], %s125
        // Predicated region
        $region25: #{tpu_custom_call.1} parent=23 // pred_check
          %p127 = pneg %p50
        $region26: #{tpu_custom_call.1} parent=23 // pred_check_branch
          %129 = sbr.rel (%p127) target = $region28
        $region27: #{tpu_custom_call.1} parent=23 // pred_region
          %131 = dma.done %s123, 128
        $region28: #{tpu_custom_call.1} parent=23 // pred_fallthru
          _
        %s132 = sand.u32 %s37, 1
        %s133 = scalar_lea.sflag [#allocation3], %s132
        %s134 = sand.u32 %s37, 1
        %s135 = smul.addr %s134, 8
        %s136 = scalar_lea.vmem [#allocation2], %s135
        %p137 = pneg %p50
        %p138 = pneg %p47
        %p139 = pneg %p76
        %p140 = pneg %p73
        %p141 = scmp.lt.s32.totalorder %s19, 1
        %s142 = scalar_select %p141, %s19, 1
        %s143 = smul.addr %s142, 8
        %s144 = scalar_lea.vmem %s1, %s143
        %p145 = scmp.lt.s32.totalorder %s19, 1
        %s146 = scalar_select %p145, %s19, 1
        %s147 = smul.addr %s146, 8
        %s148 = scalar_lea.vmem %s1, %s147
        %p149 = scmp.eq.s32.totalorder %s20, 0
        // Predicated region
        $region29: #{tpu_custom_call.1} parent=23 // pred_check
          %p150 = pneg %p149
        $region30: #{tpu_custom_call.1} parent=23 // pred_check_branch
          %152 = sbr.rel (%p150) target = $region32
        $region31: #{tpu_custom_call.1} parent=23 // pred_region
          %vm153 = vcmask 7168
          %154 = vst.msk [vmem:[%s148] sm:$0xff] %vm153, 0.0
        $region32: #{tpu_custom_call.1} parent=23 // pred_fallthru
          _
        %v155 = vld [vmem:[%s126] sm:$0xff]
        %v156 = vld [vmem:[%s148] sm:$0xff]
        %v157 = vmul.f32 %v155, %v155
        %158 = vadd.xlane.f32.xlu0 %v157
        %v159 = vpop.xlane.xlu0 %158
        %v160 = vadd.f32 %v156, %v159
        %vm161 = vcmask 7168
        %162 = vst.msk [vmem:[%s148] sm:$0xff] %vm161, %v160
        %p163 = scmp.lt.s32.totalorder %s19, 1
        %s164 = scalar_select %p163, %s19, 1
        %s165 = smul.addr %s164, 8
        %s166 = scalar_lea.vmem %s1, %s165
        // Predicated region
        $region33: #{tpu_custom_call.1} parent=23 // pred_check
          %p167 = pneg %p73
        $region34: #{tpu_custom_call.1} parent=23 // pred_check_branch
          %169 = sbr.rel (%p167) target = $region36
        $region35: #{tpu_custom_call.1} parent=23 // pred_region
          _
        $region36: #{tpu_custom_call.1} parent=23 // pred_fallthru
          _
      $region24: #{tpu_custom_call.1} parent=5 // pred_fallthru
        _
      %p170 = scmp.le.s32.totalorder 2, %s10
      // Predicated region
      $region37: #{tpu_custom_call.1} parent=5 // pred_check
        %p171 = pneg %p170
      $region38: #{tpu_custom_call.1} parent=5 // pred_check_branch
        %173 = sbr.rel (%p171) target = $region40
      $region39: #{tpu_custom_call.1} parent=5 // pred_region
        %s174 = ssub.s32 %s10, 2
        // Predicated region
        $region41: #{tpu_custom_call.1} parent=39 // pred_check
          %p175 = pneg %p79
        $region42: #{tpu_custom_call.1} parent=39 // pred_check_branch
          %177 = sbr.rel (%p175) target = $region44
        $region43: #{tpu_custom_call.1} parent=39 // pred_region
          %p178 = scmp.lt.s32.totalorder %s21, 1
          %s179 = scalar_select %p178, %s21, 1
          %s180 = smul.addr %s179, 8
          %s181 = scalar_lea.vmem %s1, %s180
        $region44: #{tpu_custom_call.1} parent=39 // pred_fallthru
          _
      $region40: #{tpu_custom_call.1} parent=5 // pred_fallthru
        _
    $region6: #{tpu_custom_call.1} parent=1 // loop_footer
      %s14 = sadd.s32 1, %s10
    $region7: #{tpu_custom_call.1} parent=1 // loop_footer_branch
      %9 = sbr.rel target = $region3
    $region8: #{tpu_custom_call.1} parent=1 // loop_exit
      _
    %182 = vsyncpa [#allocation3], 1
    %s183 = scalar_lea.sflag [#allocation3], 1
    %184 = vsyncpa %s183, 1

</llo_original>
